<compile_context>
chip_gen: v6e
topology: v6e:2x2x1
jax: 0.10.0
libtpu: 0.0.40
codegen_flags: <defaults>
</compile_context>

<pallas_src>
from functools import partial

import jax
import jax.numpy as jnp
from jax.experimental import pallas as pl
from jax.experimental.pallas import tpu as pltpu


def _round_up(x, m):
    return (x + m - 1) // m * m


# ---------- generation-aware sizing ------------------------------------------
_TILE_CANDIDATES = (128, 256, 512)
_TILE_VMEM_BUDGET = 40 << 20     # leaves headroom inside v7x's 64 MiB physical VMEM
_RESIDENT_K_BUDGET = 24 << 20    # keep k fully resident only when comfortably small
_VMEM_LIMIT_CAP = 56 << 20       # never request more than v7x can physically give


def _vmem_bytes(tile, d_pad, n_pad, resident_k):
    """Rough double-buffered VMEM footprint of one kernel configuration."""
    bf16, f32 = 2, 4
    q_blocks = 2 * tile * d_pad * bf16                    # double-buffered q tile
    k_rows = n_pad if resident_k else tile
    k_blocks = 2 * k_rows * d_pad * bf16                  # k tile (or resident k)
    rows = 3 * 2 * 8 * tile * f32                         # pos / corr / out (1,tile) blocks
    scratch = tile * d_pad * bf16 + tile * 128 * f32      # scaled-q + denom accumulator
    return q_blocks + k_blocks + rows + scratch


def _select_tile(n, d_pad):
    """Least padding first, then >=2 q tiles (v7x 2 TCs / megacore), then larger tile."""
    cands = []
    for t in _TILE_CANDIDATES:
        n_pad = _round_up(n, t)
        q_tiles = n_pad // t
        over = _vmem_bytes(t, d_pad, n_pad, resident_k=False) > _TILE_VMEM_BUDGET
        cands.append((over, n_pad, 0 if q_tiles >= 2 else 1, -t, t))
    cands.sort()
    return cands[0][-1]


# ---------- kernel -------------------------------------------------------------
def _nt_xent_kernel(q_ref, k_ref, pos_ref, corr_ref, loss_ref, qs_ref, acc_ref,
                    *, tile, inv_t, resident_k):
    kj = pl.program_id(1)

    @pl.when(kj == 0)
    def _():
        # Hoisted once per q tile (the q block index is constant along the k
        # axis): fold 1/temperature into the small [tile, d_pad] operand and
        # round to bf16 so the MXU runs at native width.
        qs_ref[...] = (q_ref[...].astype(jnp.float32)
                       * jnp.float32(inv_t)).astype(jnp.bfloat16)
        acc_ref[...] = jnp.zeros_like(acc_ref)

    if resident_k:
        start = pl.multiple_of(kj * tile, tile)
        k_blk = k_ref[pl.ds(start, tile), :]          # slice from the resident k
    else:
        k_blk = k_ref[...]                            # streamed (tile, d_pad) block

    # bf16 x bf16 -> f32 NT matmul on the MXU:  s = <q_i, k_j> / temperature.
    s = jax.lax.dot_general(
        qs_ref[...], k_blk,
        dimension_numbers=(((1,), (1,)), ((), ())),
        preferred_element_type=jnp.float32,
    )
    s_exp = jnp.exp(s)                                # EUP, [tile, tile]

    # Lane-group adds (pure VPU, static slices) into a lane-dense [tile, 128]
    # accumulator; the expensive cross-lane reduction happens once per q tile
    # in the finalize instead of once per (q, k) grid step.
    part = s_exp[:, 0:128]
    for g in range(1, tile // 128):
        part = part + s_exp[:, g * 128:(g + 1) * 128]
    acc_ref[...] += part

    @pl.when(kj == pl.num_programs(1) - 1)
    def _():
        # Row-sum of the [tile, 128] accumulator, emitted directly as a
        # lane-dense [1, tile] row: ones(1,128) NT-contracted with acc on the
        # MXU avoids any sublane->lane relayout.
        ones = jnp.ones((1, 128), dtype=jnp.float32)
        denom_row = jax.lax.dot_general(
            ones, acc_ref[...],
            dimension_numbers=(((1,), (1,)), ((), ())),
            preferred_element_type=jnp.float32)       # [1, tile]
        # corr = exp(self_sim / t) + n_pad_rows, computed wrapper-side from the
        # same bf16-rounded operands the MXU saw (cancels the diagonal term and
        # the exp(0)=1 contribution of every zero-padded k row).
        denom = denom_row - corr_ref[...]
        # -log(pos / denom) = log(denom) - s_pos / t
        loss_ref[...] = jnp.log(denom) - pos_ref[...] * jnp.float32(inv_t)


# ---------- wrapper ------------------------------------------------------------
def simclr_loss(out_1, out_2, batch_size=None, temperature=0.5, *, k_resident=None):
    """Pallas equivalent of Loss.forward(out_1, out_2, batch_size, temperature)."""
    assert out_1.shape == out_2.shape and out_1.ndim == 2
    B, D = out_1.shape
    if batch_size is not None:
        assert batch_size == B
    n = 2 * B
    inv_t = 1.0 / float(temperature)

    # Wrapper glue (O(n*d), not the hot path): concat views, positive-pair sims.
    out = jnp.concatenate([out_1, out_2], axis=0).astype(jnp.float32)      # [2B, D]
    s_pos = jnp.sum(out_1.astype(jnp.float32) * out_2.astype(jnp.float32), axis=-1)
    s_pos = jnp.concatenate([s_pos, s_pos], axis=0)                        # [2B]

    d_pad = _round_up(D, 128)
    tile = _select_tile(n, d_pad)
    n_pad = _round_up(n, tile)
    n_pad_rows = n_pad - n
    q_tiles = n_pad // tile
    k_tiles = n_pad // tile

    # Pad rows/features (zero rows corrected exactly below); bf16 feature matrix
    # feeds the MXU at native width and halves HBM traffic.
    out_p = jnp.pad(out, ((0, n_pad_rows), (0, d_pad - D)))
    out_bf = out_p.astype(jnp.bfloat16)

    # Per-row correction, lane-dense [q_tiles, tile]:
    #   corr_i = exp(<q_i, k_i>/t) + n_pad_rows, evaluated through the same
    #   bf16-rounded operands the in-kernel MXU uses (qs = bf16(f32(x_bf16)/t)),
    #   so the accumulated diagonal term cancels without an NxN mask.
    qs_bf = (out_bf.astype(jnp.float32) * inv_t).astype(jnp.bfloat16)
    self_sim = jnp.sum(qs_bf.astype(jnp.float32) * out_bf.astype(jnp.float32),
                       axis=-1)                                            # [n_pad]
    corr_2d = (jnp.exp(self_sim) + float(n_pad_rows)).reshape(q_tiles, tile)
    pos_2d = jnp.pad(s_pos, (0, n_pad_rows)).reshape(q_tiles, tile)

    if k_resident is None:
        k_resident = _vmem_bytes(tile, d_pad, n_pad, True) <= _RESIDENT_K_BUDGET
    vmem_est = _vmem_bytes(tile, d_pad, n_pad, k_resident)
    vmem_limit = int(min(max(vmem_est * 5 // 4 + (2 << 20), 16 << 20),
                         _VMEM_LIMIT_CAP))

    if k_resident:
        # DMA'd once, sliced in-kernel, instead of re-streamed per q tile.
        k_spec = pl.BlockSpec((n_pad, d_pad), lambda i, j: (0, 0))
    else:
        k_spec = pl.BlockSpec((tile, d_pad), lambda i, j: (j, 0))

    kernel = partial(_nt_xent_kernel, tile=tile, inv_t=inv_t, resident_k=k_resident)

    cost = pl.CostEstimate(
        flops=2 * n_pad * n_pad * d_pad,
        transcendentals=n_pad * n_pad,
        bytes_accessed=(n_pad * d_pad * 2
                        + (1 if k_resident else q_tiles) * n_pad * d_pad * 2
                        + 3 * n_pad * 4))

    row_loss = pl.pallas_call(
        kernel,
        out_shape=jax.ShapeDtypeStruct((q_tiles, tile), jnp.float32),
        grid_spec=pltpu.PrefetchScalarGridSpec(
            num_scalar_prefetch=0,
            grid=(q_tiles, k_tiles),
            in_specs=[
                pl.BlockSpec((tile, d_pad), lambda i, j: (i, 0)),   # q row tile
                k_spec,                                             # k rows
                pl.BlockSpec((1, tile), lambda i, j: (i, 0)),       # s_pos (lane-dense)
                pl.BlockSpec((1, tile), lambda i, j: (i, 0)),       # correction
            ],
            out_specs=pl.BlockSpec((1, tile), lambda i, j: (i, 0)),
            scratch_shapes=[
                pltpu.VMEM((tile, d_pad), jnp.bfloat16),            # scaled q (hoisted)
                pltpu.VMEM((tile, 128), jnp.float32),               # denom accumulator
            ],
        ),
        compiler_params=pltpu.CompilerParams(
            dimension_semantics=("parallel", "arbitrary"),
            vmem_limit_bytes=vmem_limit),
        cost_estimate=cost,
    )(out_bf, out_bf, pos_2d, corr_2d)

    # Mean over the 2B real rows (padded rows excluded).
    return jnp.mean(row_loss.reshape(-1)[:n])


# ---------- pure-JAX reference (mirrors the torch code) ------------------------
def _reference_loss(out_1, out_2, temperature=0.5):
    out = jnp.concatenate([out_1, out_2], axis=0).astype(jnp.float32)
    nn = out.shape[0]
    sim = jnp.exp(out @ out.T / temperature)
    mask = 1.0 - jnp.eye(nn, dtype=jnp.float32)
    denom = jnp.sum(sim * mask, axis=-1)
    pos = jnp.exp(jnp.sum(out_1.astype(jnp.float32) * out_2.astype(jnp.float32),
                          axis=-1) / temperature)
    pos = jnp.concatenate([pos, pos], axis=0)
    return jnp.mean(-jnp.log(pos / denom))


if __name__ == "__main__":
    key = jax.random.PRNGKey(0)

    def make_views(k, batch, dim):
        k1, k2 = jax.random.split(k)
        a = jax.random.normal(k1, (batch, dim), jnp.float32)
        b = jax.random.normal(k2, (batch, dim), jnp.float32)
        # SimCLR projector outputs are L2-normalized; keeps sim/t well conditioned.
        a = a / jnp.linalg.norm(a, axis=-1, keepdims=True)
        b = b / jnp.linalg.norm(b, axis=-1, keepdims=True)
        return a, b

    # Case 1: small batch (resident-k path, heavy row/feature padding correction).
    a, b = make_views(jax.random.fold_in(key, 0), 8, 32)
    loss = jax.block_until_ready(simclr_loss(a, b, batch_size=8, temperature=0.5))
    ref = _reference_loss(a, b, temperature=0.5)
    assert jnp.allclose(loss, ref, rtol=3e-2, atol=3e-2), (loss, ref)

    # Case 2: multi-tile 2x2 grid, streamed-k path forced (covers both branches).
    a, b = make_views(jax.random.fold_in(key, 1), 72, 32)
    loss = jax.block_until_ready(
        simclr_loss(a, b, batch_size=72, temperature=0.5, k_resident=False))
    ref = _reference_loss(a, b, temperature=0.5)
    assert jnp.allclose(loss, ref, rtol=3e-2, atol=3e-2), (loss, ref)

    print("KERNEL_OK")
</pallas_src>

<mosaic_0001>
module attributes {stable_mosaic.version = 11 : i64} {
  func.func @_nt_xent_kernel(%arg0: i32, %arg1: i32, %arg2: memref<128x128xbf16, #tpu.memory_space<vmem>>, %arg3: memref<128x128xbf16, #tpu.memory_space<vmem>>, %arg4: memref<1x128xf32, #tpu.memory_space<vmem>>, %arg5: memref<1x128xf32, #tpu.memory_space<vmem>>, %arg6: memref<1x128xf32, #tpu.memory_space<vmem>>, %arg7: memref<128x128xbf16, #tpu.memory_space<vmem>>, %arg8: memref<128x128xf32, #tpu.memory_space<vmem>>) attributes {dimension_semantics = [#tpu.dimension_semantics<parallel>, #tpu.dimension_semantics<arbitrary>], iteration_bounds = array<i64: 1, 1>, scalar_prefetch = 0 : i64, scratch_operands = 2 : i64, tpu.core_type = #tpu.core_type<tc>, window_params = [{transform_indices = @transform_0, window_bounds = array<i64: 128, 128>}, {pipeline_mode = #tpu.pipeline_mode<synchronous>, transform_indices = @transform_1, window_bounds = array<i64: 128, 128>}, {transform_indices = @transform_2, window_bounds = array<i64: 1, 128>}, {transform_indices = @transform_3, window_bounds = array<i64: 1, 128>}, {transform_indices = @transform_4, window_bounds = array<i64: 1, 128>}]} {
    %c0_i32 = arith.constant 0 : i32
    %0 = arith.cmpi eq, %arg1, %c0_i32 : i32
    %1 = arith.extui %0 : i1 to i32
    %c0_i32_0 = arith.constant 0 : i32
    %2 = arith.cmpi ne, %1, %c0_i32_0 : i32
    scf.if %2 {
      %c0_9 = arith.constant 0 : index
      %c0_10 = arith.constant 0 : index
      %16 = vector.load %arg2[%c0_9, %c0_10] : memref<128x128xbf16, #tpu.memory_space<vmem>>, vector<128x128xbf16>
      %17 = arith.extf %16 : vector<128x128xbf16> to vector<128x128xf32>
      %cst_11 = arith.constant 2.000000e+00 : f32
      %18 = vector.broadcast %cst_11 : f32 to vector<128x128xf32>
      %19 = arith.mulf %17, %18 : vector<128x128xf32>
      %20 = arith.truncf %19 : vector<128x128xf32> to vector<128x128xbf16>
      %c0_12 = arith.constant 0 : index
      %c0_13 = arith.constant 0 : index
      %21 = vector.load %arg7[%c0_12, %c0_13] : memref<128x128xbf16, #tpu.memory_space<vmem>>, vector<128x128xbf16>
      tpu.vector_store %arg7[%c0_12, %c0_13], %20 {strides = array<i32>} : memref<128x128xbf16, #tpu.memory_space<vmem>>, vector<128x128xbf16>,
      %cst_14 = arith.constant 0.000000e+00 : f32
      %22 = vector.broadcast %cst_14 : f32 to vector<128x128xf32>
      %c0_15 = arith.constant 0 : index
      %c0_16 = arith.constant 0 : index
      %23 = vector.load %arg8[%c0_15, %c0_16] : memref<128x128xf32, #tpu.memory_space<vmem>>, vector<128x128xf32>
      tpu.vector_store %arg8[%c0_15, %c0_16], %22 {strides = array<i32>} : memref<128x128xf32, #tpu.memory_space<vmem>>, vector<128x128xf32>,
    } else {
    }
    %c128_i32 = arith.constant 128 : i32
    %3 = arith.muli %arg1, %c128_i32 : i32
    %4 = tpu.assume_multiple %3, 128 : i32
    %5 = arith.index_cast %4 : i32 to index
    %c0 = arith.constant 0 : index
    %6 = vector.load %arg3[%5, %c0] : memref<128x128xbf16, #tpu.memory_space<vmem>>, vector<128x128xbf16>
    %c0_1 = arith.constant 0 : index
    %c0_2 = arith.constant 0 : index
    %7 = vector.load %arg7[%c0_1, %c0_2] : memref<128x128xbf16, #tpu.memory_space<vmem>>, vector<128x128xbf16>
    %cst = arith.constant dense<0.000000e+00> : vector<128x128xf32>
    %8 = tpu.matmul %7, %6, %cst {dimension_numbers = #tpu.dot_dimension_numbers<[1], [1], [0], [0], [0, 0, 1, 0], [], []>} : vector<128x128xbf16>, vector<128x128xbf16>, vector<128x128xf32> -> vector<128x128xf32>
    %9 = math.exp %8 : vector<128x128xf32>
    %c0_3 = arith.constant 0 : index
    %c0_4 = arith.constant 0 : index
    %10 = vector.load %arg8[%c0_3, %c0_4] : memref<128x128xf32, #tpu.memory_space<vmem>>, vector<128x128xf32>
    %11 = arith.addf %10, %9 : vector<128x128xf32>
    %c0_5 = arith.constant 0 : index
    %c0_6 = arith.constant 0 : index
    %12 = vector.load %arg8[%c0_5, %c0_6] : memref<128x128xf32, #tpu.memory_space<vmem>>, vector<128x128xf32>
    tpu.vector_store %arg8[%c0_5, %c0_6], %11 {strides = array<i32>} : memref<128x128xf32, #tpu.memory_space<vmem>>, vector<128x128xf32>,
    %c0_i32_7 = arith.constant 0 : i32
    %13 = arith.cmpi eq, %arg1, %c0_i32_7 : i32
    %14 = arith.extui %13 : i1 to i32
    %c0_i32_8 = arith.constant 0 : i32
    %15 = arith.cmpi ne, %14, %c0_i32_8 : i32
    scf.if %15 {
      %cst_9 = arith.constant 1.000000e+00 : f32
      %16 = vector.broadcast %cst_9 : f32 to vector<1x128xf32>
      %c0_10 = arith.constant 0 : index
      %c0_11 = arith.constant 0 : index
      %17 = vector.load %arg8[%c0_10, %c0_11] : memref<128x128xf32, #tpu.memory_space<vmem>>, vector<128x128xf32>
      %cst_12 = arith.constant dense<0.000000e+00> : vector<1x128xf32>
      %18 = tpu.matmul %16, %17, %cst_12 {dimension_numbers = #tpu.dot_dimension_numbers<[1], [1], [0], [0], [0, 0, 1, 0], [], []>} : vector<1x128xf32>, vector<128x128xf32>, vector<1x128xf32> -> vector<1x128xf32>
      %c0_13 = arith.constant 0 : index
      %c0_14 = arith.constant 0 : index
      %19 = vector.load %arg5[%c0_13, %c0_14] : memref<1x128xf32, #tpu.memory_space<vmem>>, vector<1x128xf32>
      %20 = arith.subf %18, %19 : vector<1x128xf32>
      %21 = math.log %20 : vector<1x128xf32>
      %c0_15 = arith.constant 0 : index
      %c0_16 = arith.constant 0 : index
      %22 = vector.load %arg4[%c0_15, %c0_16] : memref<1x128xf32, #tpu.memory_space<vmem>>, vector<1x128xf32>
      %cst_17 = arith.constant 2.000000e+00 : f32
      %23 = vector.broadcast %cst_17 : f32 to vector<1x128xf32>
      %24 = arith.mulf %22, %23 : vector<1x128xf32>
      %25 = arith.subf %21, %24 : vector<1x128xf32>
      %c0_18 = arith.constant 0 : index
      %c0_19 = arith.constant 0 : index
      %26 = vector.load %arg6[%c0_18, %c0_19] : memref<1x128xf32, #tpu.memory_space<vmem>>, vector<1x128xf32>
      tpu.vector_store %arg6[%c0_18, %c0_19], %25 {strides = array<i32>} : memref<1x128xf32, #tpu.memory_space<vmem>>, vector<1x128xf32>,
    } else {
    }
    return
  }
  func.func @transform_0(%arg0: i32, %arg1: i32) -> (i32, i32) {
    %c0_i32 = arith.constant 0 : i32
    %c0_i32_0 = arith.constant 0 : i32
    return %arg0, %c0_i32 : i32, i32
  }
  func.func @transform_1(%arg0: i32, %arg1: i32) -> (i32, i32) {
    %c0_i32 = arith.constant 0 : i32
    %c0_i32_0 = arith.constant 0 : i32
    %c0_i32_1 = arith.constant 0 : i32
    return %c0_i32, %c0_i32_0 : i32, i32
  }
  func.func @transform_2(%arg0: i32, %arg1: i32) -> (i32, i32) {
    %c0_i32 = arith.constant 0 : i32
    %c0_i32_0 = arith.constant 0 : i32
    return %arg0, %c0_i32 : i32, i32
  }
  func.func @transform_3(%arg0: i32, %arg1: i32) -> (i32, i32) {
    %c0_i32 = arith.constant 0 : i32
    %c0_i32_0 = arith.constant 0 : i32
    return %arg0, %c0_i32 : i32, i32
  }
  func.func @transform_4(%arg0: i32, %arg1: i32) -> (i32, i32) {
    %c0_i32 = arith.constant 0 : i32
    %c0_i32_0 = arith.constant 0 : i32
    return %arg0, %c0_i32 : i32, i32
  }
}

</mosaic_0001>

<llo_original>
// kernel: tpu_custom_call.1
$region0: #{tpu_custom_call.1}
  #allocation0 [shape = 'u32[]', space=smem, size = 0x4, offset = 0x4, fixed_abs, tag = 'smem constant byte address 0x4 - core index']
  #allocation1 [shape = 'u32[144,128]{1,0:T(1,128)}', space=vmem, size = 0x12000, scoped, tag = 'internal scratch']
  #allocation2 [shape = 'bf16[128,128]{1,0:T(8,128)(2,1)}', space=vmem, size = 0x8000, scoped, tag = 'scratch operand']
  #allocation3 [shape = 'f32[128,128]{1,0:T(8,128)}', space=vmem, size = 0x10000, scoped, tag = 'scratch operand']
  %s0 = inlined_call_operand.hbm [shape: bf16[128,128], index: 0, kind: input, shape index: {}]
  %s1 = inlined_call_operand.hbm [shape: bf16[128,128], index: 1, kind: input, shape index: {}]
  %s2 = inlined_call_operand.vmem [shape: f32[1,128], index: 2, kind: input, shape index: {}]
  %s3 = inlined_call_operand.vmem [shape: f32[1,128], index: 3, kind: input, shape index: {}]
  %s4 = inlined_call_operand.hbm [shape: f32[1,128], index: 4, kind: output, shape index: {}]
  %s5 = sld [smem:[#allocation0]]
  $region42: #{tpu_custom_call.1} parent=0
    _
  %s7 = ssub.s32 1, %s5
  %s8 = scalar_select 0, %s7, %s5
  $region1: #{tpu_custom_call.1} parent=0
    #allocation4 [shape = 'u8[32768]{0}', space=vmem, size = 0x8000, scoped, tag = 'input window, operand 0, single buffered']
    #allocation5 [shape = 's32[1]{0}', space=sflag, size = 0x4, scoped, tag = 'scoped memory for tpu_custom_call.1']
    #allocation6 [shape = 's32[1]{0}', space=sflag, size = 0x4, scoped, tag = 'scoped memory for tpu_custom_call.1']
    #allocation7 [shape = 'u8[32768]{0}', space=vmem, size = 0x8000, scoped, tag = 'input window, operand 1, single buffered']
    #allocation8 [shape = 's32[1]{0}', space=sflag, size = 0x4, scoped, tag = 'scoped memory for tpu_custom_call.1']
    #allocation9 [shape = 'u8[512]{0}', space=vmem, size = 0x400, scoped, tag = 'output window, operand 0, single buffered']
    %9 = vsyncpa [#allocation5], 0
    %10 = vsyncpa [#allocation8], 0
    %11 = vsyncpa [#allocation6], 0
    // Predicated region
    $region2: #{tpu_custom_call.1} parent=1 // pred_check
      _
    $region3: #{tpu_custom_call.1} parent=1 // pred_check_branch
      %13 = sbr.rel (0) target = $region5
    $region4: #{tpu_custom_call.1} parent=1 // pred_region
      %s15 = ssub.s32 1024, 1024
      %16 = vsyncadd [#allocation5], %s15
      %s17 = sshll.u32 [#allocation4], 4
      %s18 = int_to_ptr.vmem [resolvable:$true] %s17
      %23 = dma.hbm_to_vmem [thread:$0]  %s0, 1024, %s18, [#allocation5], 64, 64, 4
    $region5: #{tpu_custom_call.1} parent=1 // pred_fallthru
      _
    // Predicated region
    $region6: #{tpu_custom_call.1} parent=1 // pred_check
      _
    $region7: #{tpu_custom_call.1} parent=1 // pred_check_branch
      %25 = sbr.rel (0) target = $region9
    $region8: #{tpu_custom_call.1} parent=1 // pred_region
      %s27 = ssub.s32 1024, 1024
      %28 = vsyncadd [#allocation8], %s27
      %s29 = sshll.u32 [#allocation7], 4
      %s30 = int_to_ptr.vmem [resolvable:$true] %s29
      %35 = dma.hbm_to_vmem [thread:$0]  %s1, 1024, %s30, [#allocation8], 64, 64, 4
    $region9: #{tpu_custom_call.1} parent=1 // pred_fallthru
      _
    // Predicated region
    $region10: #{tpu_custom_call.1} parent=1 // pred_check
      _
    $region11: #{tpu_custom_call.1} parent=1 // pred_check_branch
      %37 = sbr.rel (0) target = $region13
    $region12: #{tpu_custom_call.1} parent=1 // pred_region
      _
    $region13: #{tpu_custom_call.1} parent=1 // pred_fallthru
      _
    // Predicated region
    $region14: #{tpu_custom_call.1} parent=1 // pred_check
      _
    $region15: #{tpu_custom_call.1} parent=1 // pred_check_branch
      %39 = sbr.rel (0) target = $region17
    $region16: #{tpu_custom_call.1} parent=1 // pred_region
      _
    $region17: #{tpu_custom_call.1} parent=1 // pred_fallthru
      _
    // Predicated region
    $region18: #{tpu_custom_call.1} parent=1 // pred_check
      _
    $region19: #{tpu_custom_call.1} parent=1 // pred_check_branch
      %41 = sbr.rel (0) target = $region21
    $region20: #{tpu_custom_call.1} parent=1 // pred_region
      %42 = dma.done [#allocation5], 1024
    $region21: #{tpu_custom_call.1} parent=1 // pred_fallthru
      _
    // Predicated region
    $region22: #{tpu_custom_call.1} parent=1 // pred_check
      _
    $region23: #{tpu_custom_call.1} parent=1 // pred_check_branch
      %44 = sbr.rel (0) target = $region25
    $region24: #{tpu_custom_call.1} parent=1 // pred_region
      %45 = dma.done [#allocation8], 1024
    $region25: #{tpu_custom_call.1} parent=1 // pred_fallthru
      _
    %p47 = scmp.eq.s32.totalorder 0, 0
    // Predicated region
    $region26: #{tpu_custom_call.1} parent=1 // pred_check
      %p48 = pneg %p47
    $region27: #{tpu_custom_call.1} parent=1 // pred_check_branch
      %50 = sbr.rel (%p48) target = $region29
    $region28: #{tpu_custom_call.1} parent=1 // pred_region
      %v51 = vld [vmem:[#allocation4] sm:$0xf]
      %v52 = vld [vmem:[#allocation4 + $0x4] sm:$0xf]
      %v53 = vld [vmem:[#allocation4 + $0x8] sm:$0xf]
      %v54 = vld [vmem:[#allocation4 + $0xc] sm:$0xf]
      %v55 = vld [vmem:[#allocation4 + $0x10] sm:$0xf]
      %v56 = vld [vmem:[#allocation4 + $0x14] sm:$0xf]
      %v57 = vld [vmem:[#allocation4 + $0x18] sm:$0xf]
      %v58 = vld [vmem:[#allocation4 + $0x1c] sm:$0xf]
      %v59 = vld [vmem:[#allocation4 + $0x20] sm:$0xf]
      %v60 = vld [vmem:[#allocation4 + $0x24] sm:$0xf]
      %v61 = vld [vmem:[#allocation4 + $0x28] sm:$0xf]
      %v62 = vld [vmem:[#allocation4 + $0x2c] sm:$0xf]
      %v63 = vld [vmem:[#allocation4 + $0x30] sm:$0xf]
      %v64 = vld [vmem:[#allocation4 + $0x34] sm:$0xf]
      %v65 = vld [vmem:[#allocation4 + $0x38] sm:$0xf]
      %v66 = vld [vmem:[#allocation4 + $0x3c] sm:$0xf]
      %v67 = vunpack.c.l.bf16 %v51
      %v68 = vunpack.c.l.bf16 %v52
      %v69 = vunpack.c.l.bf16 %v53
      %v70 = vunpack.c.l.bf16 %v54
      %v71 = vunpack.c.l.bf16 %v55
      %v72 = vunpack.c.l.bf16 %v56
      %v73 = vunpack.c.l.bf16 %v57
      %v74 = vunpack.c.l.bf16 %v58
      %v75 = vunpack.c.l.bf16 %v59
      %v76 = vunpack.c.l.bf16 %v60
      %v77 = vunpack.c.l.bf16 %v61
      %v78 = vunpack.c.l.bf16 %v62
      %v79 = vunpack.c.l.bf16 %v63
      %v80 = vunpack.c.l.bf16 %v64
      %v81 = vunpack.c.l.bf16 %v65
      %v82 = vunpack.c.l.bf16 %v66
      %v83 = vmul.f32 %v67, 2.0
      %v84 = vmul.f32 %v68, 2.0
      %v85 = vmul.f32 %v69, 2.0
      %v86 = vmul.f32 %v70, 2.0
      %v87 = vmul.f32 %v71, 2.0
      %v88 = vmul.f32 %v72, 2.0
      %v89 = vmul.f32 %v73, 2.0
      %v90 = vmul.f32 %v74, 2.0
      %v91 = vmul.f32 %v75, 2.0
      %v92 = vmul.f32 %v76, 2.0
      %v93 = vmul.f32 %v77, 2.0
      %v94 = vmul.f32 %v78, 2.0
      %v95 = vmul.f32 %v79, 2.0
      %v96 = vmul.f32 %v80, 2.0
      %v97 = vmul.f32 %v81, 2.0
      %v98 = vmul.f32 %v82, 2.0
      %v99 = vpack.c.bf16 %v84, %v83
      %v100 = vpack.c.bf16 %v86, %v85
      %v101 = vpack.c.bf16 %v88, %v87
      %v102 = vpack.c.bf16 %v90, %v89
      %v103 = vpack.c.bf16 %v92, %v91
      %v104 = vpack.c.bf16 %v94, %v93
      %v105 = vpack.c.bf16 %v96, %v95
      %v106 = vpack.c.bf16 %v98, %v97
      %v115 = vunpack.c.l.b16 %v99
      %v116 = vunpack.c.h.b16 %v99
      %v117 = vunpack.c.l.b16 %v100
      %v118 = vunpack.c.h.b16 %v100
      %v119 = vunpack.c.l.b16 %v101
      %v120 = vunpack.c.h.b16 %v101
      %v121 = vunpack.c.l.b16 %v102
      %v122 = vunpack.c.h.b16 %v102
      %v123 = vunpack.c.l.b16 %v103
      %v124 = vunpack.c.h.b16 %v103
      %v125 = vunpack.c.l.b16 %v104
      %v126 = vunpack.c.h.b16 %v104
      %v127 = vunpack.c.l.b16 %v105
      %v128 = vunpack.c.h.b16 %v105
      %v129 = vunpack.c.l.b16 %v106
      %v130 = vunpack.c.h.b16 %v106
      %v131 = vpack.c.b16 %v115, %v115
      %v132 = vpack.c.b16 %v116, %v116
      %v133 = vpack.c.b16 %v117, %v117
      %v134 = vpack.c.b16 %v118, %v118
      %v135 = vpack.c.b16 %v119, %v119
      %v136 = vpack.c.b16 %v120, %v120
      %v137 = vpack.c.b16 %v121, %v121
      %v138 = vpack.c.b16 %v122, %v122
      %v139 = vpack.c.b16 %v123, %v123
      %v140 = vpack.c.b16 %v124, %v124
      %v141 = vpack.c.b16 %v125, %v125
      %v142 = vpack.c.b16 %v126, %v126
      %v143 = vpack.c.b16 %v127, %v127
      %v144 = vpack.c.b16 %v128, %v128
      %v145 = vpack.c.b16 %v129, %v129
      %v146 = vpack.c.b16 %v130, %v130
      %163 = vst [vmem:[#allocation2] sm:$0xf] %v131
      %164 = vst [vmem:[#allocation2 + $0x4] sm:$0xf] %v132
      %165 = vst [vmem:[#allocation2 + $0x8] sm:$0xf] %v133
      %166 = vst [vmem:[#allocation2 + $0xc] sm:$0xf] %v134
      %167 = vst [vmem:[#allocation2 + $0x10] sm:$0xf] %v135
      %168 = vst [vmem:[#allocation2 + $0x14] sm:$0xf] %v136
      %169 = vst [vmem:[#allocation2 + $0x18] sm:$0xf] %v137
      %170 = vst [vmem:[#allocation2 + $0x1c] sm:$0xf] %v138
      %171 = vst [vmem:[#allocation2 + $0x20] sm:$0xf] %v139
      %172 = vst [vmem:[#allocation2 + $0x24] sm:$0xf] %v140
      %173 = vst [vmem:[#allocation2 + $0x28] sm:$0xf] %v141
      %174 = vst [vmem:[#allocation2 + $0x2c] sm:$0xf] %v142
      %175 = vst [vmem:[#allocation2 + $0x30] sm:$0xf] %v143
      %176 = vst [vmem:[#allocation2 + $0x34] sm:$0xf] %v144
      %177 = vst [vmem:[#allocation2 + $0x38] sm:$0xf] %v145
      %178 = vst [vmem:[#allocation2 + $0x3c] sm:$0xf] %v146
      %179 = vst [vmem:[#allocation3] sm:$0xff] 0.0
      %180 = vst [vmem:[#allocation3 + $0x8] sm:$0xff] 0.0
      %181 = vst [vmem:[#allocation3 + $0x10] sm:$0xff] 0.0
      %182 = vst [vmem:[#allocation3 + $0x18] sm:$0xff] 0.0
      %183 = vst [vmem:[#allocation3 + $0x20] sm:$0xff] 0.0
      %184 = vst [vmem:[#allocation3 + $0x28] sm:$0xff] 0.0
      %185 = vst [vmem:[#allocation3 + $0x30] sm:$0xff] 0.0
      %186 = vst [vmem:[#allocation3 + $0x38] sm:$0xff] 0.0
      %187 = vst [vmem:[#allocation3 + $0x40] sm:$0xff] 0.0
      %188 = vst [vmem:[#allocation3 + $0x48] sm:$0xff] 0.0
      %189 = vst [vmem:[#allocation3 + $0x50] sm:$0xff] 0.0
      %190 = vst [vmem:[#allocation3 + $0x58] sm:$0xff] 0.0
      %191 = vst [vmem:[#allocation3 + $0x60] sm:$0xff] 0.0
      %192 = vst [vmem:[#allocation3 + $0x68] sm:$0xff] 0.0
      %193 = vst [vmem:[#allocation3 + $0x70] sm:$0xff] 0.0
      %194 = vst [vmem:[#allocation3 + $0x78] sm:$0xff] 0.0
    $region29: #{tpu_custom_call.1} parent=1 // pred_fallthru
      _
    %s195 = smul.u32 0, 128
    %s196 = sshra.s32 %s195, 3
    %s197 = sand.u32 %s195, 7
    %s198 = smul.addr %s196, 4
    %s199 = scalar_lea.vmem [#allocation7], %s198
    %v200 = vld [vmem:[%s199] sm:$0xf]
    %v201 = vld [vmem:[%s199 + $0x4] sm:$0xf]
    %v202 = vld [vmem:[%s199 + $0x8] sm:$0xf]
    %v203 = vld [vmem:[%s199 + $0xc] sm:$0xf]
    %v204 = vld [vmem:[%s199 + $0x10] sm:$0xf]
    %v205 = vld [vmem:[%s199 + $0x14] sm:$0xf]
    %v206 = vld [vmem:[%s199 + $0x18] sm:$0xf]
    %v207 = vld [vmem:[%s199 + $0x1c] sm:$0xf]
    %v208 = vld [vmem:[%s199 + $0x20] sm:$0xf]
    %v209 = vld [vmem:[%s199 + $0x24] sm:$0xf]
    %v210 = vld [vmem:[%s199 + $0x28] sm:$0xf]
    %v211 = vld [vmem:[%s199 + $0x2c] sm:$0xf]
    %v212 = vld [vmem:[%s199 + $0x30] sm:$0xf]
    %v213 = vld [vmem:[%s199 + $0x34] sm:$0xf]
    %v214 = vld [vmem:[%s199 + $0x38] sm:$0xf]
    %v215 = vld [vmem:[%s199 + $0x3c] sm:$0xf]
    %v216 = vld [vmem:[#allocation2] sm:$0xf]
    %v217 = vld [vmem:[#allocation2 + $0x4] sm:$0xf]
    %v218 = vld [vmem:[#allocation2 + $0x8] sm:$0xf]
    %v219 = vld [vmem:[#allocation2 + $0xc] sm:$0xf]
    %v220 = vld [vmem:[#allocation2 + $0x10] sm:$0xf]
    %v221 = vld [vmem:[#allocation2 + $0x14] sm:$0xf]
    %v222 = vld [vmem:[#allocation2 + $0x18] sm:$0xf]
    %v223 = vld [vmem:[#allocation2 + $0x1c] sm:$0xf]
    %v224 = vld [vmem:[#allocation2 + $0x20] sm:$0xf]
    %v225 = vld [vmem:[#allocation2 + $0x24] sm:$0xf]
    %v226 = vld [vmem:[#allocation2 + $0x28] sm:$0xf]
    %v227 = vld [vmem:[#allocation2 + $0x2c] sm:$0xf]
    %v228 = vld [vmem:[#allocation2 + $0x30] sm:$0xf]
    %v229 = vld [vmem:[#allocation2 + $0x34] sm:$0xf]
    %v230 = vld [vmem:[#allocation2 + $0x38] sm:$0xf]
    %v231 = vld [vmem:[#allocation2 + $0x3c] sm:$0xf]
    %v248 = vunpack.c.l.b16 %v216
    %v249 = vunpack.c.l.b16 %v217
    %v250 = vunpack.c.l.b16 %v218
    %v251 = vunpack.c.l.b16 %v219
    %v252 = vunpack.c.l.b16 %v220
    %v253 = vunpack.c.l.b16 %v221
    %v254 = vunpack.c.l.b16 %v222
    %v255 = vunpack.c.l.b16 %v223
    %v256 = vunpack.c.l.b16 %v224
    %v257 = vunpack.c.l.b16 %v225
    %v258 = vunpack.c.l.b16 %v226
    %v259 = vunpack.c.l.b16 %v227
    %v260 = vunpack.c.l.b16 %v228
    %v261 = vunpack.c.l.b16 %v229
    %v262 = vunpack.c.l.b16 %v230
    %v263 = vunpack.c.l.b16 %v231
    %v264 = vpack.c.b16 %v249, %v248
    %v265 = vpack.c.b16 %v251, %v250
    %v266 = vpack.c.b16 %v253, %v252
    %v267 = vpack.c.b16 %v255, %v254
    %v268 = vpack.c.b16 %v257, %v256
    %v269 = vpack.c.b16 %v259, %v258
    %v270 = vpack.c.b16 %v261, %v260
    %v271 = vpack.c.b16 %v263, %v262
    %v296 = vunpack.c.l.b16 %v200
    %v297 = vunpack.c.l.b16 %v201
    %v298 = vunpack.c.l.b16 %v202
    %v299 = vunpack.c.l.b16 %v203
    %v300 = vunpack.c.l.b16 %v204
    %v301 = vunpack.c.l.b16 %v205
    %v302 = vunpack.c.l.b16 %v206
    %v303 = vunpack.c.l.b16 %v207
    %v304 = vunpack.c.l.b16 %v208
    %v305 = vunpack.c.l.b16 %v209
    %v306 = vunpack.c.l.b16 %v210
    %v307 = vunpack.c.l.b16 %v211
    %v308 = vunpack.c.l.b16 %v212
    %v309 = vunpack.c.l.b16 %v213
    %v310 = vunpack.c.l.b16 %v214
    %v311 = vunpack.c.l.b16 %v215
    %v312 = vpack.c.b16 %v297, %v296
    %v313 = vpack.c.b16 %v299, %v298
    %v314 = vpack.c.b16 %v301, %v300
    %v315 = vpack.c.b16 %v303, %v302
    %v316 = vpack.c.b16 %v305, %v304
    %v317 = vpack.c.b16 %v307, %v306
    %v318 = vpack.c.b16 %v309, %v308
    %v319 = vpack.c.b16 %v311, %v310
    %328 = vmatprep.subr.bf16.mxu0 0
    %329 = vmatpush1.bf16.xpose.msra.mxu0 %v319
    %330 = vmatprep.subr.bf16.mxu0 0
    %331 = vmatpush1.bf16.xpose.msra.mxu0 %v318
    %332 = vmatprep.subr.bf16.mxu0 0
    %333 = vmatpush1.bf16.xpose.msra.mxu0 %v317
    %334 = vmatprep.subr.bf16.mxu0 0
    %335 = vmatpush1.bf16.xpose.msra.mxu0 %v316
    %336 = vmatprep.subr.bf16.mxu0 0
    %337 = vmatpush1.bf16.xpose.msra.mxu0 %v315
    %338 = vmatprep.subr.bf16.mxu0 0
    %339 = vmatpush1.bf16.xpose.msra.mxu0 %v314
    %340 = vmatprep.subr.bf16.mxu0 0
    %341 = vmatpush1.bf16.xpose.msra.mxu0 %v313
    %342 = vmatprep.subr.bf16.mxu0 0
    %343 = vmatpush1.bf16.xpose.msra.mxu0 %v312
    %344 = vmatprep.subr.bf16.mxu0 0
    %345 = vmatpush2.bf16.xpose.msra.mxu0 0
    %346 = vmatprep.subr.bf16.mxu0 0
    %347 = vmatpush2.bf16.xpose.msra.mxu0 0
    %348 = vmatprep.subr.bf16.mxu0 0
    %349 = vmatpush2.bf16.xpose.msra.mxu0 0
    %350 = vmatprep.subr.bf16.mxu0 0
    %351 = vmatpush2.bf16.xpose.msra.mxu0 0
    %352 = vmatprep.subr.bf16.mxu0 0
    %353 = vmatpush2.bf16.xpose.msra.mxu0 0
    %354 = vmatprep.subr.bf16.mxu0 0
    %355 = vmatpush2.bf16.xpose.msra.mxu0 0
    %356 = vmatprep.subr.bf16.mxu0 0
    %357 = vmatpush2.bf16.xpose.msra.mxu0 0
    %358 = vmatprep.subr.bf16.mxu0 0
    %359 = vmatpush2.bf16.xpose.msra.mxu0 0
    %360 = vmatprep.mubr.bf16.mxu0 0
    %361 = vmatmul.mubr.bf16.gmra.mxu0 %v264
    %v362 = vpop.f32.mrf.mxu0
    %v363 = vadd.f32 0.0, %v362
    %v364 = vpop.f32.mrf.mxu0
    %v365 = vpop.f32.mrf.mxu0
    %v366 = vadd.f32 0.0, %v365
    %v367 = vpop.f32.mrf.mxu0
    %368 = vmatprep.mubr.bf16.mxu0 0
    %369 = vmatmul.mubr.bf16.gmra.mxu0 %v265
    %v370 = vpop.f32.mrf.mxu0
    %v371 = vadd.f32 0.0, %v370
    %v372 = vpop.f32.mrf.mxu0
    %v373 = vpop.f32.mrf.mxu0
    %v374 = vadd.f32 0.0, %v373
    %v375 = vpop.f32.mrf.mxu0
    %376 = vmatprep.mubr.bf16.mxu0 0
    %377 = vmatmul.mubr.bf16.gmra.mxu0 %v266
    %v378 = vpop.f32.mrf.mxu0
    %v379 = vadd.f32 0.0, %v378
    %v380 = vpop.f32.mrf.mxu0
    %v381 = vpop.f32.mrf.mxu0
    %v382 = vadd.f32 0.0, %v381
    %v383 = vpop.f32.mrf.mxu0
    %384 = vmatprep.mubr.bf16.mxu0 0
    %385 = vmatmul.mubr.bf16.gmra.mxu0 %v267
    %v386 = vpop.f32.mrf.mxu0
    %v387 = vadd.f32 0.0, %v386
    %v388 = vpop.f32.mrf.mxu0
    %v389 = vpop.f32.mrf.mxu0
    %v390 = vadd.f32 0.0, %v389
    %v391 = vpop.f32.mrf.mxu0
    %392 = vmatprep.mubr.bf16.mxu0 0
    %393 = vmatmul.mubr.bf16.gmra.mxu0 %v268
    %v394 = vpop.f32.mrf.mxu0
    %v395 = vadd.f32 0.0, %v394
    %v396 = vpop.f32.mrf.mxu0
    %v397 = vpop.f32.mrf.mxu0
    %v398 = vadd.f32 0.0, %v397
    %v399 = vpop.f32.mrf.mxu0
    %400 = vmatprep.mubr.bf16.mxu0 0
    %401 = vmatmul.mubr.bf16.gmra.mxu0 %v269
    %v402 = vpop.f32.mrf.mxu0
    %v403 = vadd.f32 0.0, %v402
    %v404 = vpop.f32.mrf.mxu0
    %v405 = vpop.f32.mrf.mxu0
    %v406 = vadd.f32 0.0, %v405
    %v407 = vpop.f32.mrf.mxu0
    %408 = vmatprep.mubr.bf16.mxu0 0
    %409 = vmatmul.mubr.bf16.gmra.mxu0 %v270
    %v410 = vpop.f32.mrf.mxu0
    %v411 = vadd.f32 0.0, %v410
    %v412 = vpop.f32.mrf.mxu0
    %v413 = vpop.f32.mrf.mxu0
    %v414 = vadd.f32 0.0, %v413
    %v415 = vpop.f32.mrf.mxu0
    %416 = vmatprep.mubr.bf16.mxu0 0
    %417 = vmatmul.mubr.bf16.gmra.mxu0 %v271
    %v418 = vpop.f32.mrf.mxu0
    %v419 = vadd.f32 0.0, %v418
    %v420 = vpop.f32.mrf.mxu0
    %v421 = vpop.f32.mrf.mxu0
    %v422 = vadd.f32 0.0, %v421
    %v423 = vpop.f32.mrf.mxu0
    %424 = vdwg.mxu0
    %v425 = vmul.f32 %v363, 1.442695
    %v426 = vpow.pop %v425
    %v427 = vmul.f32 %v366, 1.442695
    %v428 = vpow.pop %v427
    %v429 = vmul.f32 %v371, 1.442695
    %v430 = vpow.pop %v429
    %v431 = vmul.f32 %v374, 1.442695
    %v432 = vpow.pop %v431
    %v433 = vmul.f32 %v379, 1.442695
    %v434 = vpow.pop %v433
    %v435 = vmul.f32 %v382, 1.442695
    %v436 = vpow.pop %v435
    %v437 = vmul.f32 %v387, 1.442695
    %v438 = vpow.pop %v437
    %v439 = vmul.f32 %v390, 1.442695
    %v440 = vpow.pop %v439
    %v441 = vmul.f32 %v395, 1.442695
    %v442 = vpow.pop %v441
    %v443 = vmul.f32 %v398, 1.442695
    %v444 = vpow.pop %v443
    %v445 = vmul.f32 %v403, 1.442695
    %v446 = vpow.pop %v445
    %v447 = vmul.f32 %v406, 1.442695
    %v448 = vpow.pop %v447
    %v449 = vmul.f32 %v411, 1.442695
    %v450 = vpow.pop %v449
    %v451 = vmul.f32 %v414, 1.442695
    %v452 = vpow.pop %v451
    %v453 = vmul.f32 %v419, 1.442695
    %v454 = vpow.pop %v453
    %v455 = vmul.f32 %v422, 1.442695
    %v456 = vpow.pop %v455
    %v457 = vld [vmem:[#allocation3] sm:$0xff]
    %v458 = vld [vmem:[#allocation3 + $0x8] sm:$0xff]
    %v459 = vld [vmem:[#allocation3 + $0x10] sm:$0xff]
    %v460 = vld [vmem:[#allocation3 + $0x18] sm:$0xff]
    %v461 = vld [vmem:[#allocation3 + $0x20] sm:$0xff]
    %v462 = vld [vmem:[#allocation3 + $0x28] sm:$0xff]
    %v463 = vld [vmem:[#allocation3 + $0x30] sm:$0xff]
    %v464 = vld [vmem:[#allocation3 + $0x38] sm:$0xff]
    %v465 = vld [vmem:[#allocation3 + $0x40] sm:$0xff]
    %v466 = vld [vmem:[#allocation3 + $0x48] sm:$0xff]
    %v467 = vld [vmem:[#allocation3 + $0x50] sm:$0xff]
    %v468 = vld [vmem:[#allocation3 + $0x58] sm:$0xff]
    %v469 = vld [vmem:[#allocation3 + $0x60] sm:$0xff]
    %v470 = vld [vmem:[#allocation3 + $0x68] sm:$0xff]
    %v471 = vld [vmem:[#allocation3 + $0x70] sm:$0xff]
    %v472 = vld [vmem:[#allocation3 + $0x78] sm:$0xff]
    %v473 = vadd.f32 %v457, %v426
    %v474 = vadd.f32 %v458, %v428
    %v475 = vadd.f32 %v459, %v430
    %v476 = vadd.f32 %v460, %v432
    %v477 = vadd.f32 %v461, %v434
    %v478 = vadd.f32 %v462, %v436
    %v479 = vadd.f32 %v463, %v438
    %v480 = vadd.f32 %v464, %v440
    %v481 = vadd.f32 %v465, %v442
    %v482 = vadd.f32 %v466, %v444
    %v483 = vadd.f32 %v467, %v446
    %v484 = vadd.f32 %v468, %v448
    %v485 = vadd.f32 %v469, %v450
    %v486 = vadd.f32 %v470, %v452
    %v487 = vadd.f32 %v471, %v454
    %v488 = vadd.f32 %v472, %v456
    %489 = vst [vmem:[#allocation3] sm:$0xff] %v473
    %490 = vst [vmem:[#allocation3 + $0x8] sm:$0xff] %v474
    %491 = vst [vmem:[#allocation3 + $0x10] sm:$0xff] %v475
    %492 = vst [vmem:[#allocation3 + $0x18] sm:$0xff] %v476
    %493 = vst [vmem:[#allocation3 + $0x20] sm:$0xff] %v477
    %494 = vst [vmem:[#allocation3 + $0x28] sm:$0xff] %v478
    %495 = vst [vmem:[#allocation3 + $0x30] sm:$0xff] %v479
    %496 = vst [vmem:[#allocation3 + $0x38] sm:$0xff] %v480
    %497 = vst [vmem:[#allocation3 + $0x40] sm:$0xff] %v481
    %498 = vst [vmem:[#allocation3 + $0x48] sm:$0xff] %v482
    %499 = vst [vmem:[#allocation3 + $0x50] sm:$0xff] %v483
    %500 = vst [vmem:[#allocation3 + $0x58] sm:$0xff] %v484
    %501 = vst [vmem:[#allocation3 + $0x60] sm:$0xff] %v485
    %502 = vst [vmem:[#allocation3 + $0x68] sm:$0xff] %v486
    %503 = vst [vmem:[#allocation3 + $0x70] sm:$0xff] %v487
    %504 = vst [vmem:[#allocation3 + $0x78] sm:$0xff] %v488
    // Predicated region
    $region30: #{tpu_custom_call.1} parent=1 // pred_check
      %p505 = pneg %p47
    $region31: #{tpu_custom_call.1} parent=1 // pred_check_branch
      %507 = sbr.rel (%p505) target = $region33
    $region32: #{tpu_custom_call.1} parent=1 // pred_region
      %v508 = vld [vmem:[#allocation3] sm:$0xff]
      %v509 = vld [vmem:[#allocation3 + $0x8] sm:$0xff]
      %v510 = vld [vmem:[#allocation3 + $0x10] sm:$0xff]
      %v511 = vld [vmem:[#allocation3 + $0x18] sm:$0xff]
      %v512 = vld [vmem:[#allocation3 + $0x20] sm:$0xff]
      %v513 = vld [vmem:[#allocation3 + $0x28] sm:$0xff]
      %v514 = vld [vmem:[#allocation3 + $0x30] sm:$0xff]
      %v515 = vld [vmem:[#allocation3 + $0x38] sm:$0xff]
      %v516 = vld [vmem:[#allocation3 + $0x40] sm:$0xff]
      %v517 = vld [vmem:[#allocation3 + $0x48] sm:$0xff]
      %v518 = vld [vmem:[#allocation3 + $0x50] sm:$0xff]
      %v519 = vld [vmem:[#allocation3 + $0x58] sm:$0xff]
      %v520 = vld [vmem:[#allocation3 + $0x60] sm:$0xff]
      %v521 = vld [vmem:[#allocation3 + $0x68] sm:$0xff]
      %v522 = vld [vmem:[#allocation3 + $0x70] sm:$0xff]
      %v523 = vld [vmem:[#allocation3 + $0x78] sm:$0xff]
      %524 = vmatprep.subr.mxu0 0.0
      %525 = vmatpush1.xpose.msra.mxu0 %v523
      %526 = vmatprep.subr.mxu0 0.0
      %527 = vmatpush1.xpose.msra.mxu0 %v522
      %528 = vmatprep.subr.mxu0 0.0
      %529 = vmatpush1.xpose.msra.mxu0 %v521
      %530 = vmatprep.subr.mxu0 0.0
      %531 = vmatpush1.xpose.msra.mxu0 %v520
      %532 = vmatprep.subr.mxu0 0.0
      %533 = vmatpush1.xpose.msra.mxu0 %v519
      %534 = vmatprep.subr.mxu0 0.0
      %535 = vmatpush1.xpose.msra.mxu0 %v518
      %536 = vmatprep.subr.mxu0 0.0
      %537 = vmatpush1.xpose.msra.mxu0 %v517
      %538 = vmatprep.subr.mxu0 0.0
      %539 = vmatpush1.xpose.msra.mxu0 %v516
      %540 = vmatprep.subr.mxu0 0.0
      %541 = vmatpush1.xpose.msra.mxu0 %v515
      %542 = vmatprep.subr.mxu0 0.0
      %543 = vmatpush1.xpose.msra.mxu0 %v514
      %544 = vmatprep.subr.mxu0 0.0
      %545 = vmatpush1.xpose.msra.mxu0 %v513
      %546 = vmatprep.subr.mxu0 0.0
      %547 = vmatpush1.xpose.msra.mxu0 %v512
      %548 = vmatprep.subr.mxu0 0.0
      %549 = vmatpush1.xpose.msra.mxu0 %v511
      %550 = vmatprep.subr.mxu0 0.0
      %551 = vmatpush1.xpose.msra.mxu0 %v510
      %552 = vmatprep.subr.mxu0 0.0
      %553 = vmatpush1.xpose.msra.mxu0 %v509
      %554 = vmatprep.subr.mxu0 0.0
      %555 = vmatpush1.xpose.msra.mxu0 %v508
      %556 = vmatprep.subr.mxu0 0.0
      %557 = vmatpush2.xpose.msra.mxu0 0.0
      %558 = vmatprep.subr.mxu0 0.0
      %559 = vmatpush2.xpose.msra.mxu0 0.0
      %560 = vmatprep.subr.mxu0 0.0
      %561 = vmatpush2.xpose.msra.mxu0 0.0
      %562 = vmatprep.subr.mxu0 0.0
      %563 = vmatpush2.xpose.msra.mxu0 0.0
      %564 = vmatprep.subr.mxu0 0.0
      %565 = vmatpush2.xpose.msra.mxu0 0.0
      %566 = vmatprep.subr.mxu0 0.0
      %567 = vmatpush2.xpose.msra.mxu0 0.0
      %568 = vmatprep.subr.mxu0 0.0
      %569 = vmatpush2.xpose.msra.mxu0 0.0
      %570 = vmatprep.subr.mxu0 0.0
      %571 = vmatpush2.xpose.msra.mxu0 0.0
      %572 = vmatprep.subr.mxu0 0.0
      %573 = vmatpush2.xpose.msra.mxu0 0.0
      %574 = vmatprep.subr.mxu0 0.0
      %575 = vmatpush2.xpose.msra.mxu0 0.0
      %576 = vmatprep.subr.mxu0 0.0
      %577 = vmatpush2.xpose.msra.mxu0 0.0
      %578 = vmatprep.subr.mxu0 0.0
      %579 = vmatpush2.xpose.msra.mxu0 0.0
      %580 = vmatprep.subr.mxu0 0.0
      %581 = vmatpush2.xpose.msra.mxu0 0.0
      %582 = vmatprep.subr.mxu0 0.0
      %583 = vmatpush2.xpose.msra.mxu0 0.0
      %584 = vmatprep.subr.mxu0 0.0
      %585 = vmatpush2.xpose.msra.mxu0 0.0
      %586 = vmatprep.subr.mxu0 0.0
      %587 = vmatpush2.xpose.msra.mxu0 0.0
      %588 = vmatprep.mubr.f32.mxu0 0.0
      %589 = vmatmul.mubr.f32.gmra.mxu0 1.0
      %v590 = vpop.f32.mrf.mxu0
      %v591 = vadd.f32 0.0, %v590
      %v592 = vpop.f32.mrf.mxu0
      %593 = vdwg.mxu0
      %v594 = vld [vmem:[%s3] sm:$0x1]
      %v595 = vsub.f32 %v591, %v594
      %v596 = vlog2.pop %v595
      %v597 = vmul.f32 %v596, 0.6931472
      %v598 = vld [vmem:[%s2] sm:$0x1]
      %v599 = vmul.f32 %v598, 2.0
      %v600 = vsub.f32 %v597, %v599
      %601 = vst [vmem:[#allocation9] sm:$0x1] %v600
    $region33: #{tpu_custom_call.1} parent=1 // pred_fallthru
      _
    // Predicated region
    $region34: #{tpu_custom_call.1} parent=1 // pred_check
      _
    $region35: #{tpu_custom_call.1} parent=1 // pred_check_branch
      %603 = sbr.rel (0) target = $region37
    $region36: #{tpu_custom_call.1} parent=1 // pred_region
      %s605 = ssub.s32 16, 16
      %606 = vsyncadd [#allocation6], %s605
      %s608 = sshll.u32 [#allocation9], 4
      %s609 = int_to_ptr.vmem [resolvable:$true] %s608
      %611 = dma.vmem_to_hbm [thread:$0]  %s609, 16, %s4, [#allocation6]
    $region37: #{tpu_custom_call.1} parent=1 // pred_fallthru
      _
    // Predicated region
    $region38: #{tpu_custom_call.1} parent=1 // pred_check
      _
    $region39: #{tpu_custom_call.1} parent=1 // pred_check_branch
      %613 = sbr.rel (0) target = $region41
    $region40: #{tpu_custom_call.1} parent=1 // pred_region
      %614 = dma.done [#allocation6], 16
    $region41: #{tpu_custom_call.1} parent=1 // pred_fallthru
      _
    %615 = vsyncpa [#allocation5], 1
    %616 = vsyncpa [#allocation8], 1
    %617 = vsyncpa [#allocation6], 1

</llo_original>
